<compile_context>
chip_gen: v5e
topology: v5e:2x2
jax: 0.10.0
libtpu: 0.0.40
codegen_flags: <defaults>
</compile_context>

<pallas_src>
import math
from dataclasses import dataclass, field
from typing import List

import jax
import jax.numpy as jnp
from jax.experimental import pallas as pl
from jax.experimental.pallas import tpu as pltpu


# ----------------------------- Pallas kernel ------------------------------ #

_LANES = 128
_TARGET_BLOCK_BYTES = 2 * 1024 * 1024   # ~2 MiB per block (8 MiB double-buffered i/o)
_MIN_TILED_BYTES = 1 * 1024 * 1024      # below this, a single full-array block
_MAX_FULL_BLOCK_ELEMS = 32 * 1024       # cap for a (1, n) full block: (1, n) layout
                                        # pads to 8 sublanes, so keep it small


def _copy_kernel(x_ref, o_ref):
    # Identity over the current (row_block, lanes) tile.
    o_ref[...] = x_ref[...]


def _sublane_multiple(itemsize: int) -> int:
    # Sub-32-bit dtypes pack along sublanes: f32 -> 8, bf16/f16 -> 16, int8 -> 32.
    return max(8, 32 // max(1, itemsize))


def _cdiv(a: int, b: int) -> int:
    return -(-a // b)


def _round_up(a: int, b: int) -> int:
    return _cdiv(a, b) * b


def _target_rows(itemsize: int, sub: int) -> int:
    return max(sub, (_TARGET_BLOCK_BYTES // (_LANES * itemsize)) // sub * sub)


def _choose_row_block(rows: int, itemsize: int) -> int:
    """Pick the block height for a (rows, 128) slab."""
    total_bytes = rows * _LANES * itemsize
    if total_bytes <= _MIN_TILED_BYTES:
        # Single full-array block: full dims bypass the (8,128) rule and
        # per-step grid overhead would dominate at this size anyway.
        return rows
    sub = _sublane_multiple(itemsize)
    # Aim for >= ~4 grid steps (v7x megacore split), capped at the
    # VMEM-budgeted ~2 MiB block; last block may be ragged (Pallas masks it).
    return min(_target_rows(itemsize, sub), _round_up(_cdiv(rows, 4), sub))


def _pallas_copy_2d(x2d: jnp.ndarray, row_block: int) -> jnp.ndarray:
    """Tiled identity copy over a 2D slab; last block may be ragged (masked)."""
    rows, lanes = x2d.shape
    grid = (_cdiv(rows, row_block),)
    nbytes = x2d.size * x2d.dtype.itemsize
    return pl.pallas_call(
        _copy_kernel,
        out_shape=jax.ShapeDtypeStruct((rows, lanes), x2d.dtype),
        grid=grid,
        in_specs=[pl.BlockSpec((row_block, lanes), lambda i: (i, 0))],
        out_specs=pl.BlockSpec((row_block, lanes), lambda i: (i, 0)),
        compiler_params=pltpu.CompilerParams(
            dimension_semantics=("parallel",),   # lets v7x split the grid across 2 TCs
        ),
        cost_estimate=pl.CostEstimate(
            flops=0, transcendentals=0, bytes_accessed=2 * nbytes),
    )(x2d)


def pallas_identity(x: jnp.ndarray) -> jnp.ndarray:
    """Pass an arbitrary-shape array through the Pallas copy kernel."""
    shape = x.shape
    n = int(math.prod(shape)) if shape else 1
    if n == 0:
        return x  # zero-sized input: nothing to move

    itemsize = jnp.dtype(x.dtype).itemsize
    flat = x.reshape((n,))  # metadata-only for a contiguous array

    if n % _LANES == 0:
        rows = n // _LANES
        row_block = _choose_row_block(rows, itemsize)
        y2d = _pallas_copy_2d(flat.reshape((rows, _LANES)), row_block)
        return y2d.reshape(shape)

    if n <= _MAX_FULL_BLOCK_ELEMS:
        # Small non-lane-aligned array: one full-array (1, n) block, no padding.
        y2d = _pallas_copy_2d(flat.reshape((1, n)), 1)
        return y2d.reshape(shape)

    # Rare fallback: larger array whose element count is not lane-aligned.
    # TODO(synk): handle the <128-element tail with an in-kernel masked
    # pltpu.store instead of this padded extra HBM pass.
    sub = _sublane_multiple(itemsize)
    padded_n = _round_up(n, sub * _LANES)
    flat = jnp.pad(flat, (0, padded_n - n))
    rows = padded_n // _LANES
    row_block = _choose_row_block(rows, itemsize)
    y2d = _pallas_copy_2d(flat.reshape((rows, _LANES)), row_block)
    return y2d.reshape((padded_n,))[:n].reshape(shape)


# -------------------- Synthetic engine / interp_result --------------------- #

class PallasEngine:
    """Stand-in for the AIT engine: forward() runs each selected input through
    the Pallas identity kernel (the compiled AIT graph itself is opaque).

    All inputs of one forward() are processed inside a single jit so the
    per-tensor dispatch overhead is amortized into one executable launch."""

    def __init__(self):
        self._forward = jax.jit(lambda *xs: tuple(pallas_identity(x) for x in xs))

    def forward(self, python_inputs: List[jnp.ndarray]) -> List[jnp.ndarray]:
        if not python_inputs:
            return []
        return list(self._forward(*python_inputs))

    def profile(self, inputs, filename, num_iters):
        # TODO(synk): AIT per-op profiling has no Pallas equivalent here.
        raise NotImplementedError


@dataclass
class InterpResult:
    fx_input_names: List[str] = field(default_factory=list)
    input_names: List[str] = field(default_factory=list)


# ------------------------------ AITModule --------------------------------- #

class AITModule:
    def __init__(self, engine=None, interp_result=None):
        self.engine = engine
        self.interp_result = interp_result

    def __call__(self, *inputs, **kwargs):
        return self.forward(*inputs, **kwargs)

    def forward(self, *inputs, **kwargs):
        python_inputs = []
        if self.interp_result:
            inputs = list(inputs)
            for name, inp in zip(self.interp_result.fx_input_names, inputs):
                if name in self.interp_result.input_names:
                    python_inputs.append(inp)
            for name in self.interp_result.input_names:
                if name in kwargs:
                    python_inputs.append(kwargs[name])
            assert len(python_inputs) == len(self.interp_result.input_names)
        else:
            python_inputs = list(inputs)
            python_inputs.extend(kwargs.values())
        outputs = self.engine.forward(python_inputs)
        if len(outputs) == 1:
            return outputs[0]
        return tuple(outputs)

    def profile(self, inputs, filename: str, num_iters: int) -> None:
        self.engine.profile(inputs, filename, num_iters)

    @staticmethod
    def create_ait_module_wrapper(engine, interp_result, trace_ait_module, *inputs):
        mod = AITModule(engine, interp_result)
        mod(*inputs)
        # torch.jit.trace has no JAX equivalent; return the module as-is.
        return mod


# --------------------------------- main ------------------------------------ #

if __name__ == "__main__":
    key = jax.random.PRNGKey(0)
    k0, k1, k2, k3, k4, k5, k6 = jax.random.split(key, 7)

    # Small NCHW-style inputs consistent with a typical AIT-lowered conv net.
    x = jax.random.normal(k0, (2, 4, 16, 16), dtype=jnp.float32)    # selected
    aux = jax.random.normal(k1, (2, 4, 16, 16), dtype=jnp.float32)  # dropped by name filter
    w = jax.random.normal(k2, (8, 32), dtype=jnp.float32)           # selected via kwargs

    interp_result = InterpResult(
        fx_input_names=["x", "aux"],      # names of the positional fx inputs
        input_names=["x", "w"],           # names the engine actually consumes
    )
    engine = PallasEngine()
    module = AITModule(engine=engine, interp_result=interp_result)

    # forward: 'x' selected from positionals, 'aux' filtered out, 'w' from kwargs.
    out = module(x, aux, w=w)
    out = jax.tree_util.tree_map(jax.block_until_ready, out)

    # Exact pass-through semantics: outputs match the selected inputs.
    assert isinstance(out, tuple) and len(out) == 2
    assert out[0].shape == x.shape and out[0].dtype == x.dtype
    assert out[1].shape == w.shape and out[1].dtype == w.dtype
    assert bool(jnp.array_equal(out[0], x))
    assert bool(jnp.array_equal(out[1], w))

    # Single-output path returns the bare array, not a tuple.
    module_plain = AITModule(engine=engine, interp_result=None)
    single = module_plain(x)
    jax.block_until_ready(single)
    assert not isinstance(single, tuple)
    assert bool(jnp.array_equal(single, x))

    # Extra coverage of the kernel paths (still small shapes).
    a = jax.random.normal(k3, (2, 4, 50, 64), dtype=jnp.float32)    # lane-aligned full block
    b = jax.random.normal(k4, (4, 8, 32, 32), dtype=jnp.bfloat16)   # bf16 full block
    c = jax.random.normal(k5, (2, 3, 7, 5), dtype=jnp.float32)      # non-lane-aligned (1, n) block
    d = jax.random.normal(k6, (129, 255), dtype=jnp.float32)        # padded tiled fallback, ragged grid
    z = jnp.zeros((0, 4), dtype=jnp.float32)                        # zero-sized early return
    for ref in (a, b, c, d, z):
        got = jax.block_until_ready(pallas_identity(ref))
        assert got.shape == ref.shape and got.dtype == ref.dtype
        assert bool(jnp.array_equal(got, ref))

    print("KERNEL_OK")
</pallas_src>

<mosaic_0001>
module attributes {stable_mosaic.version = 11 : i64} {
  func.func @_copy_kernel(%arg0: i32, %arg1: memref<16x128xf32, #tpu.memory_space<vmem>>, %arg2: memref<16x128xf32, #tpu.memory_space<vmem>>) attributes {dimension_semantics = [#tpu.dimension_semantics<parallel>], iteration_bounds = array<i64: 1>, scalar_prefetch = 0 : i64, scratch_operands = 0 : i64, tpu.core_type = #tpu.core_type<tc>, window_params = [{transform_indices = @transform_0, window_bounds = array<i64: 16, 128>}, {transform_indices = @transform_1, window_bounds = array<i64: 16, 128>}]} {
    %c0 = arith.constant 0 : index
    %c0_0 = arith.constant 0 : index
    %0 = vector.load %arg1[%c0, %c0_0] : memref<16x128xf32, #tpu.memory_space<vmem>>, vector<16x128xf32>
    %c0_1 = arith.constant 0 : index
    %c0_2 = arith.constant 0 : index
    %1 = vector.load %arg2[%c0_1, %c0_2] : memref<16x128xf32, #tpu.memory_space<vmem>>, vector<16x128xf32>
    tpu.vector_store %arg2[%c0_1, %c0_2], %0 {strides = array<i32>} : memref<16x128xf32, #tpu.memory_space<vmem>>, vector<16x128xf32>,
    return
  }
  func.func @transform_0(%arg0: i32) -> (i32, i32) {
    %c0_i32 = arith.constant 0 : i32
    %c0_i32_0 = arith.constant 0 : i32
    return %arg0, %c0_i32 : i32, i32
  }
  func.func @transform_1(%arg0: i32) -> (i32, i32) {
    %c0_i32 = arith.constant 0 : i32
    %c0_i32_0 = arith.constant 0 : i32
    return %arg0, %c0_i32 : i32, i32
  }
}

module attributes {stable_mosaic.version = 11 : i64} {
  func.func @_copy_kernel(%arg0: i32, %arg1: memref<2x128xf32, #tpu.memory_space<vmem>>, %arg2: memref<2x128xf32, #tpu.memory_space<vmem>>) attributes {dimension_semantics = [#tpu.dimension_semantics<parallel>], iteration_bounds = array<i64: 1>, scalar_prefetch = 0 : i64, scratch_operands = 0 : i64, tpu.core_type = #tpu.core_type<tc>, window_params = [{transform_indices = @transform_0, window_bounds = array<i64: 2, 128>}, {transform_indices = @transform_1, window_bounds = array<i64: 2, 128>}]} {
    %c0 = arith.constant 0 : index
    %c0_0 = arith.constant 0 : index
    %0 = vector.load %arg1[%c0, %c0_0] : memref<2x128xf32, #tpu.memory_space<vmem>>, vector<2x128xf32>
    %c0_1 = arith.constant 0 : index
    %c0_2 = arith.constant 0 : index
    %1 = vector.load %arg2[%c0_1, %c0_2] : memref<2x128xf32, #tpu.memory_space<vmem>>, vector<2x128xf32>
    tpu.vector_store %arg2[%c0_1, %c0_2], %0 {strides = array<i32>} : memref<2x128xf32, #tpu.memory_space<vmem>>, vector<2x128xf32>,
    return
  }
  func.func @transform_0(%arg0: i32) -> (i32, i32) {
    %c0_i32 = arith.constant 0 : i32
    %c0_i32_0 = arith.constant 0 : i32
    return %arg0, %c0_i32 : i32, i32
  }
  func.func @transform_1(%arg0: i32) -> (i32, i32) {
    %c0_i32 = arith.constant 0 : i32
    %c0_i32_0 = arith.constant 0 : i32
    return %arg0, %c0_i32 : i32, i32
  }
}

</mosaic_0001>

<llo_original>
// kernel: _lambda_.3
$region0: #{_lambda_.3}
  #allocation0 [shape = 'u32[]', space=smem, size = 0x4, offset = 0x4, fixed_abs, tag = 'smem constant byte address 0x4 - core index']
  #allocation1 [shape = 'u32[72,128]{1,0:T(1,128)}', space=vmem, size = 0x9000, scoped, tag = 'internal scratch']
  %s0 = inlined_call_operand.vmem [shape: f32[2,128], index: 0, kind: input, shape index: {}]
  %s1 = inlined_call_operand.vmem [shape: f32[2,128], index: 1, kind: output, shape index: {}]
  %s2 = sld [smem:[#allocation0]]
  $region14: #{_lambda_.3} parent=0
    _
  %s4 = ssub.s32 1, %s2
  %s5 = scalar_select 0, %s4, %s2
  // Predicated region
  $region2: #{_lambda_.3} parent=0 // pred_check
    _
  $region3: #{_lambda_.3} parent=0 // pred_check_branch
    %7 = sbr.rel (0) target = $region5
  $region4: #{_lambda_.3} parent=0 // pred_region
    _
  $region5: #{_lambda_.3} parent=0 // pred_fallthru
    _
  %v8 = vld [vmem:[%s0] sm:$0x3]
  %9 = vst [vmem:[%s1] sm:$0x3] %v8
  // Predicated region
  $region6: #{_lambda_.3} parent=0 // pred_check
    _
  $region7: #{_lambda_.3} parent=0 // pred_check_branch
    %11 = sbr.rel (0) target = $region9
  $region8: #{_lambda_.3} parent=0 // pred_region
    _
  $region9: #{_lambda_.3} parent=0 // pred_fallthru
    _
  // Predicated region
  $region10: #{_lambda_.3} parent=0 // pred_check
    _
  $region11: #{_lambda_.3} parent=0 // pred_check_branch
    %13 = sbr.rel (0) target = $region13
  $region12: #{_lambda_.3} parent=0 // pred_region
    _
  $region13: #{_lambda_.3} parent=0 // pred_fallthru
    _

// kernel: _lambda_.2
$region0: #{_lambda_.2}
  #allocation0 [shape = 'u32[]', space=smem, size = 0x4, offset = 0x4, fixed_abs, tag = 'smem constant byte address 0x4 - core index']
  #allocation1 [shape = 'u32[72,128]{1,0:T(1,128)}', space=vmem, size = 0x9000, scoped, tag = 'internal scratch']
  %s0 = inlined_call_operand.vmem [shape: f32[16,128], index: 0, kind: input, shape index: {}]
  %s1 = inlined_call_operand.vmem [shape: f32[16,128], index: 1, kind: output, shape index: {}]
  %s2 = sld [smem:[#allocation0]]
  $region14: #{_lambda_.2} parent=0
    _
  %s4 = ssub.s32 1, %s2
  %s5 = scalar_select 0, %s4, %s2
  // Predicated region
  $region2: #{_lambda_.2} parent=0 // pred_check
    _
  $region3: #{_lambda_.2} parent=0 // pred_check_branch
    %7 = sbr.rel (0) target = $region5
  $region4: #{_lambda_.2} parent=0 // pred_region
    _
  $region5: #{_lambda_.2} parent=0 // pred_fallthru
    _
  %v8 = vld [vmem:[%s0] sm:$0xff]
  %v9 = vld [vmem:[%s0 + $0x8] sm:$0xff]
  %10 = vst [vmem:[%s1] sm:$0xff] %v8
  %11 = vst [vmem:[%s1 + $0x8] sm:$0xff] %v9
  // Predicated region
  $region6: #{_lambda_.2} parent=0 // pred_check
    _
  $region7: #{_lambda_.2} parent=0 // pred_check_branch
    %13 = sbr.rel (0) target = $region9
  $region8: #{_lambda_.2} parent=0 // pred_region
    _
  $region9: #{_lambda_.2} parent=0 // pred_fallthru
    _
  // Predicated region
  $region10: #{_lambda_.2} parent=0 // pred_check
    _
  $region11: #{_lambda_.2} parent=0 // pred_check_branch
    %15 = sbr.rel (0) target = $region13
  $region12: #{_lambda_.2} parent=0 // pred_region
    _
  $region13: #{_lambda_.2} parent=0 // pred_fallthru
    _

</llo_original>
